<compile_context>
chip_gen: v6e
topology: v6e:2x2x1
jax: 0.10.0
libtpu: 0.0.40
codegen_flags: <defaults>
</compile_context>

<pallas_src>
import functools

import jax
import jax.numpy as jnp
from jax.experimental import pallas as pl
from jax.experimental.pallas import tpu as pltpu

# Soft -inf "no edge" log-potential.  Note: rounds to ~-99840 in bf16 — numerically
# benign for softmax masking.
NONEDGE_LOGPOT = -100000.0


def _round_up(x, m):
    return ((x + m - 1) // m) * m


def _largest_divisor_tile(t, candidates):
    """Largest candidate dividing t (t is always a multiple of 128 here)."""
    for c in candidates:
        if t % c == 0:
            return c
    return t


def _gather_from_table(logp, idx):
    """out[r, c] = logp[0, idx[r, c]] via the TPU lane dynamic-gather.

    logp: (1, V) f32.  idx: (R, C) int32 with values in [0, V).
    Indices are presented to take_along_axis in (R, V) chunks so operand and indices
    always have identical shapes (the reliably-lowered vgather form).
    # TODO(synk): for very large V, tile the log-prob table instead of broadcasting
    # it to (R, V) and padding index chunks to width V.
    """
    R, C = idx.shape
    V = logp.shape[-1]
    src = jnp.broadcast_to(logp, (R, V))
    outs = []
    for c0 in range(0, C, V):
        w = min(V, C - c0)
        chunk = idx[:, c0:c0 + w]
        if w < V:  # widen with in-bounds dummy indices so shapes match exactly
            chunk = jnp.concatenate([chunk, jnp.zeros((R, V - w), jnp.int32)], axis=-1)
        g = jnp.take_along_axis(src, chunk, axis=-1)
        outs.append(g[:, :w] if w < V else g)
    return outs[0] if len(outs) == 1 else jnp.concatenate(outs, axis=-1)


def _log_softmax_kernel(theta_ref, logp_ref, *, inv_temperature):
    logits = theta_ref[...].astype(jnp.float32) * inv_temperature
    mx = jnp.max(logits, axis=-1, keepdims=True)
    lse = mx + jnp.log(jnp.sum(jnp.exp(logits - mx), axis=-1, keepdims=True))
    logp_ref[...] = logits - lse


def _elem_gather_kernel(enc_ref, pos_pat_ref, logp_ref,
                        ids_ref, mask_ref, pos_ref, pot_ref, *, pad_token_id):
    """Elementwise enc -> (input_ids, attention_mask, position_ids, edge_log_pot)."""
    enc = enc_ref[...]                       # (B, TT) int32
    logp = logp_ref[...]                     # (1, V) f32
    valid = enc >= 0
    mask_i = valid.astype(jnp.int32)
    mask_ref[...] = mask_i
    ids_ref[...] = jnp.where(valid, enc, pad_token_id)
    # TODO(synk): padded slots get position 0 (collides with real position 0), as in
    # the previously accepted approximation of extract_position_ids.
    pos_ref[...] = pos_pat_ref[...] * mask_i
    g = _gather_from_table(logp, jnp.maximum(enc, 0))
    pot_ref[...] = jnp.where(valid, g, NONEDGE_LOGPOT)


def _dp_stats_kernel(enc_dp_ref, logp_ref, stats_ref, *, M, L):
    """Forward algorithm + expectation-semiring entropy over lattice-block columns.

    enc_dp rows r = m*L + l, cols c = b*N + n (padded columns hold -1).
    Output stats rows: 0 entropy, 1 block length, 2 last-node log alpha.
    """
    enc = enc_dp_ref[...]                    # (M*L, BC) int32
    logp = logp_ref[...]                     # (1, V) f32
    valid = enc >= 0
    g = _gather_from_table(logp, jnp.maximum(enc, 0))
    pot = jnp.where(valid, g, NONEDGE_LOGPOT)          # (M*L, BC), stays VMEM-only
    BC = pot.shape[-1]

    # block length = count of valid single-character (m == 0) edges
    len_f = jnp.sum(valid[:L, :].astype(jnp.float32), axis=0, keepdims=True)  # (1, BC)

    zero = jnp.zeros((1, BC), jnp.float32)
    a_win = [zero]   # sliding window: a_win[m] = alpha[j-1-m]
    r_win = [zero]
    a_last = zero
    r_last = zero
    for j in range(1, L + 1):
        terms = []
        for m in range(min(M, j)):           # edge of length m+1 ending at char j-1
            s = pot[m * L + (j - 1):m * L + j, :]                 # (1, BC) static slice
            terms.append((a_win[m] + s, r_win[m] + s))
        # fused logsumexp + expectation update (M exps, 1 log, 1 approx reciprocal)
        hi = terms[0][0]
        for t_, _ in terms[1:]:
            hi = jnp.maximum(hi, t_)
        ssum = jnp.zeros_like(hi)
        rsum = jnp.zeros_like(hi)
        for t_, rt in terms:
            e = jnp.exp(t_ - hi)
            ssum = ssum + e
            rsum = rsum + e * rt
        a_j = hi + jnp.log(ssum)
        r_j = rsum * pl.reciprocal(ssum, approx=True)
        # in-loop length selection (node j == block length)
        sel = (len_f == float(j)).astype(jnp.float32)
        a_last = a_last + sel * a_j
        r_last = r_last + sel * r_j
        # slide the window (keep only the last M nodes live)
        a_win = [a_j] + a_win[:M - 1]
        r_win = [r_j] + r_win[:M - 1]

    stats_ref[...] = jnp.concatenate([a_last - r_last, len_f, a_last], axis=0)


def _attn_bias_kernel(maskq_ref, potk_ref, bias_ref):
    qv = maskq_ref[...] > 0                  # (1, TQ, 1)
    potk = potk_ref[...]                     # (1, 1, TK) f32; invalid keys already NONEDGE
    bias = jnp.where(qv, potk, NONEDGE_LOGPOT)          # (1, TQ, TK) f32
    bias_ref[...] = bias.astype(bias_ref.dtype)
    # TODO(synk): bopt's attention_bias also encodes lattice edge-compatibility
    # (overlap / path constraints); only padding masking + key-edge potential bias
    # is reproduced here.


def lattice_tokenizer_forward(forward_encodings, theta, *, temperature=1.0,
                              pad_token_id=0, bias_dtype=jnp.bfloat16):
    """forward_encodings: (B, N, M, L) int32 (-1 = no edge); theta: (1, V) unigram logits.

    bias_dtype defaults to bfloat16 (halves the dominant (B,T,T) HBM writeback); pass
    jnp.float32 to recover full-precision bias.
    """
    B, N, M, L = forward_encodings.shape
    V = theta.shape[-1]
    T = N * M * L
    BN = B * N
    Tpad = max(128, _round_up(T, 128))       # lane-dense token axis
    BNp = max(128, _round_up(BN, 128))       # lane-dense DP column count

    fe = forward_encodings.astype(jnp.int32)
    enc_bt = fe.reshape(B, T)
    if Tpad > T:
        enc_bt = jnp.pad(enc_bt, ((0, 0), (0, Tpad - T)), constant_values=-1)

    # DP layout: rows r = m*L + l, cols c = b*N + n, padded with -1 (cheap int32 transpose)
    enc_dp = jnp.transpose(fe, (2, 3, 0, 1)).reshape(M * L, BN)
    if BNp > BN:
        enc_dp = jnp.pad(enc_dp, ((0, 0), (0, BNp - BN)), constant_values=-1)

    # end-character position of each edge slot (tiny constant input, host-side glue)
    t_idx = jnp.arange(Tpad, dtype=jnp.int32)
    pos_pattern = ((t_idx // (M * L)) * L + (t_idx % L)).reshape(1, Tpad)

    theta_f = theta.astype(jnp.float32).reshape(1, V)

    # --- kernel 0: unigram LM log-probs --------------------------------------------
    logp = pl.pallas_call(
        functools.partial(_log_softmax_kernel, inv_temperature=1.0 / float(temperature)),
        grid=(1,),
        in_specs=[pl.BlockSpec((1, V), lambda i: (0, 0))],
        out_specs=pl.BlockSpec((1, V), lambda i: (0, 0)),
        out_shape=jax.ShapeDtypeStruct((1, V), jnp.float32),
        compiler_params=pltpu.CompilerParams(dimension_semantics=("arbitrary",)),
    )(theta_f)

    # --- kernel A1: elementwise extraction + potential gather, tiled over T ---------
    TT = _largest_divisor_tile(Tpad, (2048, 1024, 512, 256, 128))
    (input_ids_p, attention_mask_p, position_ids_p, pot_bt) = pl.pallas_call(
        functools.partial(_elem_gather_kernel, pad_token_id=int(pad_token_id)),
        grid=(Tpad // TT,),
        in_specs=[
            pl.BlockSpec((B, TT), lambda i: (0, i)),
            pl.BlockSpec((1, TT), lambda i: (0, i)),
            pl.BlockSpec((1, V), lambda i: (0, 0)),
        ],
        out_specs=(
            pl.BlockSpec((B, TT), lambda i: (0, i)),
            pl.BlockSpec((B, TT), lambda i: (0, i)),
            pl.BlockSpec((B, TT), lambda i: (0, i)),
            pl.BlockSpec((B, TT), lambda i: (0, i)),
        ),
        out_shape=(
            jax.ShapeDtypeStruct((B, Tpad), jnp.int32),      # input_ids
            jax.ShapeDtypeStruct((B, Tpad), jnp.int32),      # attention_mask
            jax.ShapeDtypeStruct((B, Tpad), jnp.int32),      # position_ids
            jax.ShapeDtypeStruct((B, Tpad), jnp.float32),    # edge log-potentials (B,T)
        ),
        compiler_params=pltpu.CompilerParams(
            dimension_semantics=("parallel",),
            vmem_limit_bytes=32 * 1024 * 1024),
    )(enc_bt, pos_pattern, logp)

    # --- kernel A2: forward algorithm + entropy, tiled over B*N columns -------------
    BC = _largest_divisor_tile(BNp, (512, 256, 128))
    stats = pl.pallas_call(
        functools.partial(_dp_stats_kernel, M=M, L=L),
        grid=(BNp // BC,),
        in_specs=[
            pl.BlockSpec((M * L, BC), lambda i: (0, i)),
            pl.BlockSpec((1, V), lambda i: (0, 0)),
        ],
        out_specs=pl.BlockSpec((3, BC), lambda i: (0, i)),
        out_shape=jax.ShapeDtypeStruct((3, BNp), jnp.float32),  # ent / len / alpha
        compiler_params=pltpu.CompilerParams(
            dimension_semantics=("parallel",),
            vmem_limit_bytes=32 * 1024 * 1024),
    )(enc_dp, logp)

    # --- kernel B: attention bias, lane-dense tiles, bf16 output --------------------
    TQ = _largest_divisor_tile(Tpad, (512, 256, 128))
    TK = _largest_divisor_tile(Tpad, (2048, 1024, 512, 256, 128))
    maskq = attention_mask_p.reshape(B, Tpad, 1)
    potk = pot_bt.reshape(B, 1, Tpad)
    attention_bias_p = pl.pallas_call(
        _attn_bias_kernel,
        grid=(B, Tpad // TQ, Tpad // TK),
        in_specs=[
            pl.BlockSpec((1, TQ, 1), lambda b, qi, ki: (b, qi, 0)),
            pl.BlockSpec((1, 1, TK), lambda b, qi, ki: (b, 0, ki)),
        ],
        out_specs=pl.BlockSpec((1, TQ, TK), lambda b, qi, ki: (b, qi, ki)),
        out_shape=jax.ShapeDtypeStruct((B, Tpad, Tpad), bias_dtype),
        compiler_params=pltpu.CompilerParams(
            dimension_semantics=("parallel", "parallel", "parallel"),
            vmem_limit_bytes=64 * 1024 * 1024),
    )(maskq, potk)

    # --- host-side layout plumbing (slices only where padding was added) ------------
    input_ids = input_ids_p[:, :T] if Tpad > T else input_ids_p
    attention_mask = attention_mask_p[:, :T] if Tpad > T else attention_mask_p
    position_ids = position_ids_p[:, :T] if Tpad > T else position_ids_p
    pot_flat = pot_bt[:, :T] if Tpad > T else pot_bt
    edge_log_potentials = pot_flat.reshape(B, N, M, L)   # free reshape
    attention_bias = attention_bias_p[:, :T, :T] if Tpad > T else attention_bias_p

    stats_r = stats[:, :BN].reshape(3, B, N)
    ent = stats_r[0]            # segmentation entropy per block
    lengths = stats_r[1]        # block lengths (characters)
    forward_alpha = stats_r[2]  # last-node log alphas
    nchars = lengths.sum()
    entropy_scalar = ent.sum() / nchars

    type_ids = jnp.zeros((B, T), jnp.int32)   # K == 1 -> single segment (all zeros)

    return dict(
        input_ids=input_ids,
        attention_mask=attention_mask,
        position_ids=position_ids,
        type_ids=type_ids,
        attention_bias=attention_bias,
        entropy=entropy_scalar,
        nchars=nchars,
        edge_log_potentials=edge_log_potentials,
        forward_encodings=forward_encodings,
        forward_alpha=forward_alpha,
    )


if __name__ == "__main__":
    # TODO(synk): integerize_for_forward / vocabulary / memoizer / collapse_padding are
    # host string processing with no Pallas equivalent; synthetic lattice encodings
    # are built here instead.
    B, N, M, L, V = 2, 2, 8, 8, 256  # batch, max_blocks(*K), max_unit_length, max_block_length, vocab
    key = jax.random.PRNGKey(0)
    k1, k2, k3, k4 = jax.random.split(key, 4)

    theta = jax.random.normal(k1, (1, V), jnp.float32)          # unigram LM logits
    blk_len = jax.random.randint(k2, (B, N), 5, L + 1)          # block lengths in [5, L]
    ids = jax.random.randint(k3, (B, N, M, L), 1, V)            # candidate vocab ids
    keep = jax.random.uniform(k4, (B, N, M, L)) < 0.6

    m_idx = jnp.arange(M).reshape(1, 1, M, 1)
    l_idx = jnp.arange(L).reshape(1, 1, 1, L)
    within = (l_idx < blk_len[:, :, None, None]) & (m_idx <= l_idx)
    present = within & ((m_idx == 0) | keep)                    # all single-char edges present
    forward_encodings = jnp.where(present, ids, -1).astype(jnp.int32)

    out = lattice_tokenizer_forward(forward_encodings, theta, temperature=1.0, pad_token_id=0)
    jax.block_until_ready(out)
    print("KERNEL_OK")
</pallas_src>

<mosaic_0001>
module attributes {stable_mosaic.version = 11 : i64} {
  func.func @_log_softmax_kernel(%arg0: i32, %arg1: memref<1x256xf32, #tpu.memory_space<vmem>>, %arg2: memref<1x256xf32, #tpu.memory_space<vmem>>) attributes {dimension_semantics = [#tpu.dimension_semantics<arbitrary>], iteration_bounds = array<i64: 1>, scalar_prefetch = 0 : i64, scratch_operands = 0 : i64, tpu.core_type = #tpu.core_type<tc>, window_params = [{pipeline_mode = #tpu.pipeline_mode<synchronous>, transform_indices = @transform_0, window_bounds = array<i64: 1, 256>}, {pipeline_mode = #tpu.pipeline_mode<synchronous>, transform_indices = @transform_1, window_bounds = array<i64: 1, 256>}]} {
    %c0 = arith.constant 0 : index
    %c0_0 = arith.constant 0 : index
    %0 = vector.load %arg1[%c0, %c0_0] : memref<1x256xf32, #tpu.memory_space<vmem>>, vector<1x256xf32>
    %cst = arith.constant 1.000000e+00 : f32
    %1 = vector.broadcast %cst : f32 to vector<1x256xf32>
    %2 = arith.mulf %0, %1 : vector<1x256xf32>
    %cst_1 = arith.constant dense<0xFF800000> : vector<1xf32>
    %3 = vector.multi_reduction <maximumf>, %2, %cst_1 [1] : vector<1x256xf32> to vector<1xf32>
    %4 = vector.shape_cast %3 : vector<1xf32> to vector<1x1xf32>
    %5 = vector.broadcast %4 : vector<1x1xf32> to vector<1x256xf32>
    %6 = arith.subf %2, %5 : vector<1x256xf32>
    %7 = math.exp %6 : vector<1x256xf32>
    %cst_2 = arith.constant dense<0.000000e+00> : vector<1xf32>
    %8 = vector.multi_reduction <add>, %7, %cst_2 [1] : vector<1x256xf32> to vector<1xf32>
    %9 = vector.shape_cast %8 : vector<1xf32> to vector<1x1xf32>
    %10 = math.log %9 : vector<1x1xf32>
    %11 = arith.addf %4, %10 : vector<1x1xf32>
    %12 = vector.broadcast %11 : vector<1x1xf32> to vector<1x256xf32>
    %13 = arith.subf %2, %12 : vector<1x256xf32>
    %c0_3 = arith.constant 0 : index
    %c0_4 = arith.constant 0 : index
    %14 = vector.load %arg2[%c0_3, %c0_4] : memref<1x256xf32, #tpu.memory_space<vmem>>, vector<1x256xf32>
    tpu.vector_store %arg2[%c0_3, %c0_4], %13 {strides = array<i32>} : memref<1x256xf32, #tpu.memory_space<vmem>>, vector<1x256xf32>,
    return
  }
  func.func @transform_0(%arg0: i32) -> (i32, i32) {
    %c0_i32 = arith.constant 0 : i32
    %c0_i32_0 = arith.constant 0 : i32
    %c0_i32_1 = arith.constant 0 : i32
    return %c0_i32, %c0_i32_0 : i32, i32
  }
  func.func @transform_1(%arg0: i32) -> (i32, i32) {
    %c0_i32 = arith.constant 0 : i32
    %c0_i32_0 = arith.constant 0 : i32
    %c0_i32_1 = arith.constant 0 : i32
    return %c0_i32, %c0_i32_0 : i32, i32
  }
}

</mosaic_0001>

<llo_original>
// kernel: tpu_custom_call.1
$region0: #{tpu_custom_call.1}
  #allocation0 [shape = 'u32[]', space=smem, size = 0x4, offset = 0x4, fixed_abs, tag = 'smem constant byte address 0x4 - core index']
  #allocation1 [shape = 'u32[144,128]{1,0:T(1,128)}', space=vmem, size = 0x12000, scoped, tag = 'internal scratch']
  %s0 = inlined_call_operand.hbm [shape: f32[1,256], index: 0, kind: input, shape index: {}]
  %s1 = inlined_call_operand.hbm [shape: f32[1,256], index: 1, kind: output, shape index: {}]
  %s2 = sld [smem:[#allocation0]]
  $region18: #{tpu_custom_call.1} parent=0
    _
  %s4 = ssub.s32 1, %s2
  %s5 = scalar_select 0, %s4, %s2
  $region1: #{tpu_custom_call.1} parent=0
    #allocation2 [shape = 'u8[1024]{0}', space=vmem, size = 0x400, scoped, tag = 'input window, operand 0, single buffered']
    #allocation3 [shape = 's32[1]{0}', space=sflag, size = 0x4, scoped, tag = 'scoped memory for tpu_custom_call.1']
    #allocation4 [shape = 's32[1]{0}', space=sflag, size = 0x4, scoped, tag = 'scoped memory for tpu_custom_call.1']
    #allocation5 [shape = 'u8[1024]{0}', space=vmem, size = 0x400, scoped, tag = 'output window, operand 0, single buffered']
    %6 = vsyncpa [#allocation3], 0
    %7 = vsyncpa [#allocation4], 0
    // Predicated region
    $region2: #{tpu_custom_call.1} parent=1 // pred_check
      _
    $region3: #{tpu_custom_call.1} parent=1 // pred_check_branch
      %9 = sbr.rel (0) target = $region5
    $region4: #{tpu_custom_call.1} parent=1 // pred_region
      %s11 = ssub.s32 32, 32
      %12 = vsyncadd [#allocation3], %s11
      %s14 = sshll.u32 [#allocation2], 4
      %s15 = int_to_ptr.vmem [resolvable:$true] %s14
      %17 = dma.hbm_to_vmem [thread:$0]  %s0, 32, %s15, [#allocation3]
    $region5: #{tpu_custom_call.1} parent=1 // pred_fallthru
      _
    // Predicated region
    $region6: #{tpu_custom_call.1} parent=1 // pred_check
      _
    $region7: #{tpu_custom_call.1} parent=1 // pred_check_branch
      %19 = sbr.rel (0) target = $region9
    $region8: #{tpu_custom_call.1} parent=1 // pred_region
      %20 = dma.done [#allocation3], 32
    $region9: #{tpu_custom_call.1} parent=1 // pred_fallthru
      _
    %v21 = vld [vmem:[#allocation2] sm:$0x3]
    %v23 = vlaneseq
    %v24 = vshrl.u32 %v23, 7
    %v25 = vsub.s32 0, %v24
    %v26 = vrot.slane %v21, %v25
    %v27 = vlaneseq
    %v28 = vshrl.u32 %v27, 7
    %v29 = vsub.s32 1, %v28
    %v30 = vrot.slane %v21, %v29
    %vm33 = vcmask 1040384
    %v34 = vsel %vm33, %v26, -inf
    %v35 = vsel %vm33, %v30, -inf
    %v36 = vmax.f32 %v34, %v35
    %37 = vmax.xlane.f32.xlu0 %v36
    %v38 = vpop.xlane.xlu0 %37
    %v40 = vlaneseq
    %v41 = vshrl.u32 %v40, 7
    %v42 = vsub.s32 0, %v41
    %v43 = vrot.slane %v38, %v42
    %v45 = vsub.f32 %v21, %v43
    %v46 = vmul.f32 %v45, 1.442695
    %v47 = vpow.pop %v46
    %v49 = vlaneseq
    %v50 = vshrl.u32 %v49, 7
    %v51 = vsub.s32 0, %v50
    %v52 = vrot.slane %v47, %v51
    %v53 = vlaneseq
    %v54 = vshrl.u32 %v53, 7
    %v55 = vsub.s32 1, %v54
    %v56 = vrot.slane %v47, %v55
    %v59 = vsel %vm33, %v52, 0.0
    %v60 = vsel %vm33, %v56, 0.0
    %v61 = vadd.f32 %v59, %v60
    %62 = vadd.xlane.f32.xlu0 %v61
    %v63 = vpop.xlane.xlu0 %62
    %v64 = vlog2.pop %v63
    %v65 = vmul.f32 %v64, 0.6931472
    %v66 = vadd.f32 %v38, %v65
    %v68 = vlaneseq
    %v69 = vshrl.u32 %v68, 7
    %v70 = vsub.s32 0, %v69
    %v71 = vrot.slane %v66, %v70
    %v73 = vsub.f32 %v21, %v71
    %v74 = vlaneseq
    %vm75 = vcmp.ge.s32.totalorder %v74, 0
    %vm76 = vcmp.lt.s32.totalorder %v74, 256
    %vm77 = vmand %vm75, %vm76
    %78 = vst.msk [vmem:[#allocation5] sm:$0x3] %vm77, %v73
    // Predicated region
    $region10: #{tpu_custom_call.1} parent=1 // pred_check
      _
    $region11: #{tpu_custom_call.1} parent=1 // pred_check_branch
      %80 = sbr.rel (0) target = $region13
    $region12: #{tpu_custom_call.1} parent=1 // pred_region
      %s82 = ssub.s32 32, 32
      %83 = vsyncadd [#allocation4], %s82
      %s85 = sshll.u32 [#allocation5], 4
      %s86 = int_to_ptr.vmem [resolvable:$true] %s85
      %88 = dma.vmem_to_hbm [thread:$0]  %s86, 32, %s1, [#allocation4]
    $region13: #{tpu_custom_call.1} parent=1 // pred_fallthru
      _
    // Predicated region
    $region14: #{tpu_custom_call.1} parent=1 // pred_check
      _
    $region15: #{tpu_custom_call.1} parent=1 // pred_check_branch
      %90 = sbr.rel (0) target = $region17
    $region16: #{tpu_custom_call.1} parent=1 // pred_region
      %91 = dma.done [#allocation4], 32
    $region17: #{tpu_custom_call.1} parent=1 // pred_fallthru
      _
    %92 = vsyncpa [#allocation3], 1
    %93 = vsyncpa [#allocation4], 1

</llo_original>
